<compile_context>
chip_gen: v7x
topology: tpu7x:2x2x1
jax: 0.10.0
libtpu: 0.0.40
codegen_flags: <defaults>
</compile_context>

<pallas_src>
import functools

import numpy as np
import jax
import jax.numpy as jnp
from jax import lax
from jax.experimental import pallas as pl
from jax.experimental.pallas import tpu as pltpu


_NEG_BIG = -1e30                      # finite "-inf" used for masking
_VMEM_LIMIT_BYTES = 48 * 1024 * 1024  # > v5e's 16 MiB scoped default, < v7x's 64 MiB


def _elu(x):
    # ELU with alpha=1 (torch.nn.functional.elu default), elementwise.
    return jnp.where(x > 0, x, jnp.expm1(jnp.minimum(x, 0.0)))


def _round_up(x, m):
    return ((x + m - 1) // m) * m


# ----------------------------------------------------------------------------
# Pass 1: projection pre-pass  (ft = h @ W, el^T = A_l^T x h, er = h @ A_r)
# Runs once over the src layer; the attention pass then streams these tiles.
# ----------------------------------------------------------------------------
def _project_kernel(h_ref, w_ref, alT_ref, arN_ref, ft_ref, elT_ref, er_ref):
    h = h_ref[...]                                              # (ts, in_dim) bf16
    ft = jnp.dot(h, w_ref[...], preferred_element_type=jnp.float32)   # (ts, HD)
    ft_ref[...] = ft.astype(jnp.bfloat16)
    # el^T[h, s] = <h_s, A_l[:, h]>  -- all heads in ONE dense-K MXU op,
    # produced directly in the transposed (H, ts) layout the attention pass needs.
    elT_ref[...] = lax.dot_general(alT_ref[...], h, (((1,), (1,)), ((), ())),
                                   preferred_element_type=jnp.float32)
    # er[s, h] = <h_s, A_r[:, h]>  (natural layout; only the first n_dst rows used)
    er_ref[...] = jnp.dot(h, arN_ref[...], preferred_element_type=jnp.float32)


# ----------------------------------------------------------------------------
# Pass 2: masked online-softmax attention + aggregation (one GAT layer)
# Grid: (dst tiles ["parallel"], src tiles ["arbitrary" reduction]).
# ----------------------------------------------------------------------------
def _gat_attn_kernel(adj_ref, ft_ref, elT_ref, er_ref, bias_ref, *rest,
                     num_heads, out_dim, alpha, residual, res_identity,
                     aggregate, use_activation):
    if residual and not res_identity:
        hdst_ref, wr_ref, br_ref, out_ref, m_sc, l_sc, acc_sc = rest
    elif residual:
        hdst_ref, out_ref, m_sc, l_sc, acc_sc = rest
    else:
        out_ref, m_sc, l_sc, acc_sc = rest

    H, D = num_heads, out_dim
    j = pl.program_id(1)                        # src-tile (reduction) axis

    # ---- prologue (first src tile): zero the online-softmax state ----
    # m is floored at 0 (softmax is shift-invariant); masked logits then
    # underflow exp() to exactly 0, so no second mask select is needed.
    @pl.when(j == 0)
    def _():
        m_sc[...] = jnp.zeros_like(m_sc)
        l_sc[...] = jnp.zeros_like(l_sc)
        acc_sc[...] = jnp.zeros_like(acc_sc)

    # ---- per (dst tile, src tile) step ----
    mask_bias = jnp.where(adj_ref[...] != 0, 0.0, _NEG_BIG)     # (td, ts) f32, once/step
    ft = ft_ref[...]                                            # (ts, HD) bf16
    elT = elT_ref[...]                                          # (H, ts)  f32
    er = er_ref[...]                                            # (td, H)  f32
    td = er.shape[0]

    m_prev = m_sc[...]                                          # (td, H)  one load
    l_prev = l_sc[...]                                          # (td, H)  one load
    acc_prev = acc_sc[...]                                      # (td, HD) one load

    m_cols, l_cols, scale_cols, contrib_cols = [], [], [], []
    for h in range(H):
        e = er[:, h:h + 1] + elT[h:h + 1, :] + mask_bias        # (td, ts)
        e = jnp.maximum(e, alpha * e)                           # leaky_relu
        mh_prev = m_prev[:, h:h + 1]
        mh = jnp.maximum(mh_prev, jnp.max(e, axis=1, keepdims=True))
        sc = jnp.exp(mh_prev - mh)                              # rescale old state
        p = jnp.exp(e - mh)                                     # masked entries -> 0
        m_cols.append(mh)
        scale_cols.append(sc)
        l_cols.append(sc * l_prev[:, h:h + 1] + jnp.sum(p, axis=1, keepdims=True))
        contrib_cols.append(jnp.dot(p.astype(jnp.bfloat16), ft[:, h * D:(h + 1) * D],
                                    preferred_element_type=jnp.float32))

    # ---- batched, lane-dense scratch updates (one store per array per step) ----
    m_sc[...] = jnp.concatenate(m_cols, axis=1)                 # (td, H)
    l_sc[...] = jnp.concatenate(l_cols, axis=1)                 # (td, H)
    scale_b = jnp.concatenate(
        [jnp.broadcast_to(s, (td, D)) for s in scale_cols], axis=1)   # (td, HD)
    acc_sc[...] = scale_b * acc_prev + jnp.concatenate(contrib_cols, axis=1)

    # ---- epilogue (last src tile): normalize, bias, residual, aggregate, act ----
    @pl.when(j == pl.num_programs(1) - 1)
    def _():
        td_e = acc_sc.shape[0]
        l = jnp.maximum(l_sc[...], 1e-30)                       # guard zero-degree rows
        inv_l = pl.reciprocal(l, approx=True)                   # (td, H) on EUP
        inv_b = jnp.concatenate(
            [jnp.broadcast_to(inv_l[:, h:h + 1], (td_e, D)) for h in range(H)], axis=1)
        ret = acc_sc[...] * inv_b + bias_ref[...]               # one hoisted bias add
        if residual:
            if res_identity:                                    # in_dim == out_dim
                hd = hdst_ref[...].astype(jnp.float32)
                ret = ret + jnp.concatenate([hd] * H, axis=1)
            else:
                ret = ret + (jnp.dot(hdst_ref[...], wr_ref[...],
                                     preferred_element_type=jnp.float32)
                             + br_ref[...])
        if aggregate == 'concat':
            if use_activation:
                ret = _elu(ret)
            out_ref[...] = ret
        else:                                                   # 'mean'
            mean = ret[:, 0:D]
            for h in range(1, H):
                mean = mean + ret[:, h * D:(h + 1) * D]
            mean = mean * (1.0 / H)
            if use_activation:
                mean = _elu(mean)
            out_ref[...] = mean


# ----------------------------------------------------------------------------
# Wrapper: one GraphAttentionNodeFlow layer = projection pass + attention pass
# ----------------------------------------------------------------------------
def gat_layer_pallas(h_src, adj, params, *, n_dst, num_heads, out_dim, alpha,
                     residual, res_identity, aggregate, use_activation,
                     dst_tile=512, src_tile=1024):
    n_src, in_dim = h_src.shape
    assert adj.shape == (n_dst, n_src)
    assert n_dst <= n_src, "NodeFlow dst nodes are a prefix of the src layer"
    if res_identity:
        assert in_dim == out_dim, "identity residual requires in_dim == out_dim"

    f32, bf16 = jnp.float32, jnp.bfloat16
    H, D = num_heads, out_dim
    HD = H * D
    out_feats = HD if aggregate == 'concat' else D

    # ---- tile sizes (padded graph; no fall-back-to-full-dim) ----
    # dst tiles 32-aligned (int8 adjacency packs 32 rows per sublane group);
    # src tiles 128-aligned (lane axis of the adjacency / elT).
    td_cap = min(_round_up(dst_tile, 32), _round_up(n_dst, 32))
    n_dst_tiles = pl.cdiv(n_dst, td_cap)
    if n_dst >= 128 and n_dst_tiles < 2:
        n_dst_tiles = 2            # >=2 dst tiles -> both v7x TensorCores get work
    td = _round_up(pl.cdiv(n_dst, n_dst_tiles), 32)
    n_dst_p = _round_up(n_dst, td)

    ts_cap = min(_round_up(src_tile, 128), _round_up(n_src, 128))
    n_src_tiles = pl.cdiv(n_src, ts_cap)
    ts = _round_up(pl.cdiv(n_src, n_src_tiles), 128)
    n_src_p = _round_up(n_src, ts)
    n_src_tiles = n_src_p // ts

    # ---- host-side operand prep ----
    # Fold attention vectors into the projection: A_l[:, h] = W[:, hD:(h+1)D] @ a_l[h].
    W = params['W'].astype(f32)                                # (in_dim, HD)
    W3 = W.reshape(in_dim, H, D)
    A_l = jnp.einsum('khd,hd->kh', W3, params['a_l'].astype(f32))   # (in_dim, H)
    A_r = jnp.einsum('khd,hd->kh', W3, params['a_r'].astype(f32))   # (in_dim, H)

    h_bf = h_src.astype(bf16)
    h_bf_p = jnp.pad(h_bf, ((0, n_src_p - n_src), (0, 0)))
    adj_p = jnp.pad((adj != 0).astype(jnp.int8),
                    ((0, n_dst_p - n_dst), (0, n_src_p - n_src)))
    bias_row = params['bias'].reshape(1, HD).astype(f32)

    # ---- pass 1: projection (ft bf16, el^T, er) over src tiles ----
    ft_bf, elT, er_all = pl.pallas_call(
        _project_kernel,
        grid=(n_src_tiles,),
        in_specs=[
            pl.BlockSpec((ts, in_dim), lambda j: (j, 0)),
            pl.BlockSpec((in_dim, HD), lambda j: (0, 0)),
            pl.BlockSpec((H, in_dim), lambda j: (0, 0)),
            pl.BlockSpec((in_dim, H), lambda j: (0, 0)),
        ],
        out_specs=[
            pl.BlockSpec((ts, HD), lambda j: (j, 0)),
            pl.BlockSpec((H, ts), lambda j: (0, j)),
            pl.BlockSpec((ts, H), lambda j: (j, 0)),
        ],
        out_shape=[
            jax.ShapeDtypeStruct((n_src_p, HD), bf16),
            jax.ShapeDtypeStruct((H, n_src_p), f32),
            jax.ShapeDtypeStruct((n_src_p, H), f32),
        ],
        compiler_params=pltpu.CompilerParams(
            dimension_semantics=("parallel",),
            vmem_limit_bytes=_VMEM_LIMIT_BYTES),
    )(h_bf_p, W.astype(bf16), A_l.T.astype(bf16), A_r.astype(bf16))

    # dst nodes of the block are the first n_dst nodes of the src layer.
    er_dst = jnp.pad(er_all[:n_dst], ((0, n_dst_p - n_dst), (0, 0)))

    inputs = [adj_p, ft_bf, elT, er_dst, bias_row]
    in_specs = [
        pl.BlockSpec((td, ts), lambda i, j: (i, j)),        # adjacency tile (int8)
        pl.BlockSpec((ts, HD), lambda i, j: (j, 0)),        # projected src features
        pl.BlockSpec((H, ts), lambda i, j: (0, j)),         # src attention logits^T
        pl.BlockSpec((td, H), lambda i, j: (i, 0)),         # dst attention logits
        pl.BlockSpec((1, HD), lambda i, j: (0, 0)),         # ret_bias (lane-flat)
    ]
    if residual:
        hdst_p = jnp.pad(h_bf[:n_dst], ((0, n_dst_p - n_dst), (0, 0)))
        inputs.append(hdst_p)
        in_specs.append(pl.BlockSpec((td, in_dim), lambda i, j: (i, 0)))
        if not res_identity:
            inputs += [params['Wr'].astype(bf16),
                       params['br'].reshape(1, HD).astype(f32)]
            in_specs += [pl.BlockSpec((in_dim, HD), lambda i, j: (0, 0)),
                         pl.BlockSpec((1, HD), lambda i, j: (0, 0))]

    kernel = functools.partial(
        _gat_attn_kernel, num_heads=H, out_dim=D, alpha=alpha,
        residual=residual, res_identity=res_identity, aggregate=aggregate,
        use_activation=use_activation)

    out_p = pl.pallas_call(
        kernel,
        grid=(n_dst_p // td, n_src_tiles),
        in_specs=in_specs,
        out_specs=pl.BlockSpec((td, out_feats), lambda i, j: (i, 0)),
        out_shape=jax.ShapeDtypeStruct((n_dst_p, out_feats), f32),
        scratch_shapes=[
            pltpu.VMEM((td, H), f32),     # m  (running max per head, floored at 0)
            pltpu.VMEM((td, H), f32),     # l  (softmax normalizer per head)
            pltpu.VMEM((td, HD), f32),    # acc (weighted feature sums)
        ],
        compiler_params=pltpu.CompilerParams(
            dimension_semantics=("parallel", "arbitrary"),
            vmem_limit_bytes=_VMEM_LIMIT_BYTES),
    )(*inputs)
    return out_p[:n_dst]


# ----------------------------------------------------------------------------
# Pure-JAX reference (un-fused el/er path; bf16 MXU inputs, f32 accumulation)
# ----------------------------------------------------------------------------
def gat_layer_ref(h, adj, params, *, n_dst, num_heads, out_dim, alpha,
                  residual, res_identity, aggregate, use_activation):
    f32, bf16 = jnp.float32, jnp.bfloat16
    H, D = num_heads, out_dim
    h_b = h.astype(bf16)
    ft = jnp.dot(h_b, params['W'].astype(bf16),
                 preferred_element_type=f32).reshape(h.shape[0], H, D)
    ft_b = ft.astype(bf16)
    el = jnp.einsum('nhd,hd->nh', ft_b, params['a_l'].astype(bf16),
                    preferred_element_type=f32)
    er = jnp.einsum('nhd,hd->nh', ft_b[:n_dst], params['a_r'].astype(bf16),
                    preferred_element_type=f32)
    e = er[:, None, :] + el[None, :, :]                   # (N_dst, N_src, H)
    e = jnp.where(e > 0, e, alpha * e)
    mask = (adj != 0)[:, :, None]
    s = jnp.where(mask, jnp.exp(e), 0.0)
    norm = s.sum(axis=1)                                  # (N_dst, H)
    agg = jnp.einsum('njh,jhd->nhd', s.astype(bf16), ft_b,
                     preferred_element_type=f32)          # (N_dst, H, D)
    ret = agg / norm[:, :, None] + params['bias'][None]
    if residual:
        if res_identity:
            ret = ret + h_b[:n_dst].astype(f32)[:, None, :]
        else:
            res = (jnp.dot(h_b[:n_dst], params['Wr'].astype(bf16),
                           preferred_element_type=f32)
                   + params['br']).reshape(n_dst, H, D)
            ret = ret + res
    if aggregate == 'concat':
        ret = ret.reshape(n_dst, H * D)
    else:
        ret = ret.mean(axis=1)
    if use_activation:
        ret = _elu(ret)
    return ret


# ----------------------------------------------------------------------------
# Parameter init (deterministic, mirrors __init_params shapes)
# ----------------------------------------------------------------------------
def xavier_uniform(key, shape, fan_in, fan_out, gain):
    bound = gain * np.sqrt(6.0 / (fan_in + fan_out))
    return jax.random.uniform(key, shape, jnp.float32, -bound, bound)


def make_layer_params(key, in_dim, out_dim, num_heads):
    hd = num_heads * out_dim
    gain = np.sqrt((in_dim + hd) / (in_dim + out_dim))
    k = jax.random.split(key, 4)
    return {
        'W': xavier_uniform(k[0], (in_dim, hd), in_dim, hd, gain),          # fc (no bias)
        'a_l': xavier_uniform(k[1], (num_heads, out_dim), out_dim, 1, 1.0), # attention
        'a_r': xavier_uniform(k[2], (num_heads, out_dim), out_dim, 1, 1.0),
        'bias': jnp.zeros((num_heads, out_dim), jnp.float32),               # ret_bias
        'Wr': xavier_uniform(k[3], (in_dim, hd), in_dim, hd, gain),         # res_fc weight
        'br': jnp.zeros((1, hd), jnp.float32),                              # res_fc bias
    }


# ----------------------------------------------------------------------------
# Model: GATNodeFlow(num_layers=1) => 2 GAT layers over a 3-layer NodeFlow
# ----------------------------------------------------------------------------
def build_gat_nodeflow_configs(in_dim, num_hidden, num_heads, num_classes,
                               num_layers, residual):
    cfgs = []
    cfgs.append(dict(in_dim=in_dim, out_dim=num_hidden[0], num_heads=num_heads[0],
                     residual=False, aggregate='concat', use_activation=True))
    for l in range(1, num_layers):
        cfgs.append(dict(in_dim=num_hidden[l - 1] * num_heads[l - 1],
                         out_dim=num_hidden[l], num_heads=num_heads[l],
                         residual=residual, aggregate='concat', use_activation=True))
    cfgs.append(dict(in_dim=num_hidden[-1] * num_heads[-2], out_dim=num_classes,
                     num_heads=num_heads[-1], residual=residual,
                     aggregate='mean', use_activation=False))
    return cfgs


def gat_nodeflow_forward(features, adjs, layer_params, layer_cfgs, layer_fn):
    h = features
    for adj, params, cfg in zip(adjs, layer_params, layer_cfgs):
        h = layer_fn(
            h, adj, params,
            n_dst=adj.shape[0], num_heads=cfg['num_heads'], out_dim=cfg['out_dim'],
            alpha=0.2, residual=cfg['residual'],
            res_identity=(cfg['residual'] and cfg['in_dim'] == cfg['out_dim']),
            aggregate=cfg['aggregate'], use_activation=cfg['use_activation'])
    return h


if __name__ == "__main__":
    # Synthetic NodeFlow: layer sizes 32 -> 16 -> 8; dst nodes of each block are
    # the first N_dst nodes of the src layer (so the residual gather is arange).
    N0, N1, N2 = 32, 16, 8
    in_dim, num_hidden, num_heads, num_classes = 16, [8], [4, 2], 8
    num_layers, residual = 1, True

    key = jax.random.PRNGKey(0)
    k_feat, k_a0, k_a1, k_p0, k_p1 = jax.random.split(key, 5)

    features = 0.5 * jax.random.normal(k_feat, (N0, in_dim), jnp.float32)

    def make_adj(k, n_dst, n_src):
        a = (jax.random.uniform(k, (n_dst, n_src)) < 0.4).astype(jnp.float32)
        eye = jnp.zeros((n_dst, n_src)).at[jnp.arange(n_dst), jnp.arange(n_dst)].set(1.0)
        return jnp.maximum(a, eye)  # guarantee at least one (self) edge per dst

    adjs = [make_adj(k_a0, N1, N0), make_adj(k_a1, N2, N1)]

    cfgs = build_gat_nodeflow_configs(in_dim, num_hidden, num_heads, num_classes,
                                      num_layers, residual)
    param_keys = [k_p0, k_p1]
    layer_params = [make_layer_params(pk, c['in_dim'], c['out_dim'], c['num_heads'])
                    for pk, c in zip(param_keys, cfgs)]

    out = gat_nodeflow_forward(features, adjs, layer_params, cfgs, gat_layer_pallas)
    out = jax.block_until_ready(out)

    ref = gat_nodeflow_forward(features, adjs, layer_params, cfgs, gat_layer_ref)
    # Tolerance covers the bf16 rounding shift from folding a_l/a_r into the
    # projection (kernel: h @ (W a); reference: (h @ W) @ a, both bf16-in/f32-acc).
    np.testing.assert_allclose(np.asarray(out), np.asarray(ref), rtol=3e-2, atol=3e-2)

    assert out.shape == (N2, num_classes)
    print("KERNEL_OK")
</pallas_src>

<mosaic_0001>
module attributes {stable_mosaic.version = 11 : i64} {
  func.func @_project_kernel(%arg0: i32, %arg1: memref<128x16xbf16, #tpu.memory_space<vmem>>, %arg2: memref<16x32xbf16, #tpu.memory_space<vmem>>, %arg3: memref<4x16xbf16, #tpu.memory_space<vmem>>, %arg4: memref<16x4xbf16, #tpu.memory_space<vmem>>, %arg5: memref<128x32xbf16, #tpu.memory_space<vmem>>, %arg6: memref<4x128xf32, #tpu.memory_space<vmem>>, %arg7: memref<128x4xf32, #tpu.memory_space<vmem>>) attributes {dimension_semantics = [#tpu.dimension_semantics<parallel>], iteration_bounds = array<i64: 1>, scalar_prefetch = 0 : i64, scratch_operands = 0 : i64, tpu.core_type = #tpu.core_type<tc>, window_params = [{transform_indices = @transform_0, window_bounds = array<i64: 128, 16>}, {pipeline_mode = #tpu.pipeline_mode<synchronous>, transform_indices = @transform_1, window_bounds = array<i64: 16, 32>}, {pipeline_mode = #tpu.pipeline_mode<synchronous>, transform_indices = @transform_2, window_bounds = array<i64: 4, 16>}, {pipeline_mode = #tpu.pipeline_mode<synchronous>, transform_indices = @transform_3, window_bounds = array<i64: 16, 4>}, {transform_indices = @transform_4, window_bounds = array<i64: 128, 32>}, {transform_indices = @transform_5, window_bounds = array<i64: 4, 128>}, {transform_indices = @transform_6, window_bounds = array<i64: 128, 4>}]} {
    %c0 = arith.constant 0 : index
    %c0_0 = arith.constant 0 : index
    %0 = vector.load %arg1[%c0, %c0_0] : memref<128x16xbf16, #tpu.memory_space<vmem>>, vector<128x16xbf16>
    %c0_1 = arith.constant 0 : index
    %c0_2 = arith.constant 0 : index
    %1 = vector.load %arg2[%c0_1, %c0_2] : memref<16x32xbf16, #tpu.memory_space<vmem>>, vector<16x32xbf16>
    %cst = arith.constant dense<0.000000e+00> : vector<128x32xf32>
    %2 = tpu.matmul %0, %1, %cst {dimension_numbers = #tpu.dot_dimension_numbers<[1], [0], [0], [1], [0, 0, 1, 1], [], []>} : vector<128x16xbf16>, vector<16x32xbf16>, vector<128x32xf32> -> vector<128x32xf32>
    %3 = arith.truncf %2 : vector<128x32xf32> to vector<128x32xbf16>
    %c0_3 = arith.constant 0 : index
    %c0_4 = arith.constant 0 : index
    %4 = vector.load %arg5[%c0_3, %c0_4] : memref<128x32xbf16, #tpu.memory_space<vmem>>, vector<128x32xbf16>
    tpu.vector_store %arg5[%c0_3, %c0_4], %3 {strides = array<i32>} : memref<128x32xbf16, #tpu.memory_space<vmem>>, vector<128x32xbf16>,
    %c0_5 = arith.constant 0 : index
    %c0_6 = arith.constant 0 : index
    %5 = vector.load %arg3[%c0_5, %c0_6] : memref<4x16xbf16, #tpu.memory_space<vmem>>, vector<4x16xbf16>
    %cst_7 = arith.constant dense<0.000000e+00> : vector<4x128xf32>
    %6 = tpu.matmul %5, %0, %cst_7 {dimension_numbers = #tpu.dot_dimension_numbers<[1], [1], [0], [0], [0, 0, 1, 0], [], []>} : vector<4x16xbf16>, vector<128x16xbf16>, vector<4x128xf32> -> vector<4x128xf32>
    %c0_8 = arith.constant 0 : index
    %c0_9 = arith.constant 0 : index
    %7 = vector.load %arg6[%c0_8, %c0_9] : memref<4x128xf32, #tpu.memory_space<vmem>>, vector<4x128xf32>
    tpu.vector_store %arg6[%c0_8, %c0_9], %6 {strides = array<i32>} : memref<4x128xf32, #tpu.memory_space<vmem>>, vector<4x128xf32>,
    %c0_10 = arith.constant 0 : index
    %c0_11 = arith.constant 0 : index
    %8 = vector.load %arg4[%c0_10, %c0_11] : memref<16x4xbf16, #tpu.memory_space<vmem>>, vector<16x4xbf16>
    %cst_12 = arith.constant dense<0.000000e+00> : vector<128x4xf32>
    %9 = tpu.matmul %0, %8, %cst_12 {dimension_numbers = #tpu.dot_dimension_numbers<[1], [0], [0], [1], [0, 0, 1, 1], [], []>} : vector<128x16xbf16>, vector<16x4xbf16>, vector<128x4xf32> -> vector<128x4xf32>
    %c0_13 = arith.constant 0 : index
    %c0_14 = arith.constant 0 : index
    %10 = vector.load %arg7[%c0_13, %c0_14] : memref<128x4xf32, #tpu.memory_space<vmem>>, vector<128x4xf32>
    tpu.vector_store %arg7[%c0_13, %c0_14], %9 {strides = array<i32>} : memref<128x4xf32, #tpu.memory_space<vmem>>, vector<128x4xf32>,
    return
  }
  func.func @transform_0(%arg0: i32) -> (i32, i32) {
    %c0_i32 = arith.constant 0 : i32
    %c0_i32_0 = arith.constant 0 : i32
    return %arg0, %c0_i32 : i32, i32
  }
  func.func @transform_1(%arg0: i32) -> (i32, i32) {
    %c0_i32 = arith.constant 0 : i32
    %c0_i32_0 = arith.constant 0 : i32
    %c0_i32_1 = arith.constant 0 : i32
    return %c0_i32, %c0_i32_0 : i32, i32
  }
  func.func @transform_2(%arg0: i32) -> (i32, i32) {
    %c0_i32 = arith.constant 0 : i32
    %c0_i32_0 = arith.constant 0 : i32
    %c0_i32_1 = arith.constant 0 : i32
    return %c0_i32, %c0_i32_0 : i32, i32
  }
  func.func @transform_3(%arg0: i32) -> (i32, i32) {
    %c0_i32 = arith.constant 0 : i32
    %c0_i32_0 = arith.constant 0 : i32
    %c0_i32_1 = arith.constant 0 : i32
    return %c0_i32, %c0_i32_0 : i32, i32
  }
  func.func @transform_4(%arg0: i32) -> (i32, i32) {
    %c0_i32 = arith.constant 0 : i32
    %c0_i32_0 = arith.constant 0 : i32
    return %arg0, %c0_i32 : i32, i32
  }
  func.func @transform_5(%arg0: i32) -> (i32, i32) {
    %c0_i32 = arith.constant 0 : i32
    %c0_i32_0 = arith.constant 0 : i32
    return %c0_i32, %arg0 : i32, i32
  }
  func.func @transform_6(%arg0: i32) -> (i32, i32) {
    %c0_i32 = arith.constant 0 : i32
    %c0_i32_0 = arith.constant 0 : i32
    return %arg0, %c0_i32 : i32, i32
  }
}

</mosaic_0001>

<llo_original>
// kernel: tpu_custom_call.1
$region0: #{tpu_custom_call.1}
  #allocation0 [shape = 'u32[]', space=smem, size = 0x4, offset = 0x4, fixed_abs, tag = 'smem constant byte address 0x4 - core index']
  #allocation1 [shape = 'u32[144,128]{1,0:T(1,128)}', space=vmem, size = 0x12000, scoped, tag = 'internal scratch']
  %s0 = inlined_call_operand.vmem [shape: bf16[128,16], index: 0, kind: input, shape index: {}]
  %s1 = inlined_call_operand.vmem [shape: bf16[16,32], index: 1, kind: input, shape index: {}]
  %s2 = inlined_call_operand.vmem [shape: bf16[4,16], index: 2, kind: input, shape index: {}]
  %s3 = inlined_call_operand.vmem [shape: bf16[16,4], index: 3, kind: input, shape index: {}]
  %s4 = inlined_call_operand.vmem [shape: bf16[128,32], index: 4, kind: output, shape index: {0}]
  %s5 = inlined_call_operand.hbm [shape: f32[4,128], index: 5, kind: output, shape index: {1}]
  %s6 = inlined_call_operand.vmem [shape: f32[128,4], index: 6, kind: output, shape index: {2}]
  %7 = xla_tuple %s4, %s5, %s6
  %s8 = sld [smem:[#allocation0]]
  $region42: #{tpu_custom_call.1} parent=0
    _
  %s10 = ssub.s32 1, %s8
  %s11 = scalar_select 0, %s10, %s8
  $region1: #{tpu_custom_call.1} parent=0
    #allocation2 [shape = 'u8[2048]{0}', space=vmem, size = 0x800, scoped, tag = 'output window, operand 1, single buffered']
    #allocation3 [shape = 's32[1]{0}', space=sflag, size = 0x4, scoped, tag = 'scoped memory for tpu_custom_call.1']
    %12 = vsyncpa [#allocation3], 0
    // Predicated region
    $region2: #{tpu_custom_call.1} parent=1 // pred_check
      _
    $region3: #{tpu_custom_call.1} parent=1 // pred_check_branch
      %14 = sbr.rel (0) target = $region5
    $region4: #{tpu_custom_call.1} parent=1 // pred_region
      _
    $region5: #{tpu_custom_call.1} parent=1 // pred_fallthru
      _
    // Predicated region
    $region6: #{tpu_custom_call.1} parent=1 // pred_check
      _
    $region7: #{tpu_custom_call.1} parent=1 // pred_check_branch
      %16 = sbr.rel (0) target = $region9
    $region8: #{tpu_custom_call.1} parent=1 // pred_region
      _
    $region9: #{tpu_custom_call.1} parent=1 // pred_fallthru
      _
    // Predicated region
    $region10: #{tpu_custom_call.1} parent=1 // pred_check
      _
    $region11: #{tpu_custom_call.1} parent=1 // pred_check_branch
      %18 = sbr.rel (0) target = $region13
    $region12: #{tpu_custom_call.1} parent=1 // pred_region
      _
    $region13: #{tpu_custom_call.1} parent=1 // pred_fallthru
      _
    // Predicated region
    $region14: #{tpu_custom_call.1} parent=1 // pred_check
      _
    $region15: #{tpu_custom_call.1} parent=1 // pred_check_branch
      %20 = sbr.rel (0) target = $region17
    $region16: #{tpu_custom_call.1} parent=1 // pred_region
      _
    $region17: #{tpu_custom_call.1} parent=1 // pred_fallthru
      _
    %v22 = vld [vmem:[%s0] sm:$0xf]
    %v23 = vld [vmem:[%s0 + $0x4] sm:$0xf]
    %v24 = vld [vmem:[%s0 + $0x8] sm:$0xf]
    %v25 = vld [vmem:[%s0 + $0xc] sm:$0xf]
    %v26 = vld [vmem:[%s0 + $0x10] sm:$0xf]
    %v27 = vld [vmem:[%s0 + $0x14] sm:$0xf]
    %v28 = vld [vmem:[%s0 + $0x18] sm:$0xf]
    %v29 = vld [vmem:[%s0 + $0x1c] sm:$0xf]
    %v30 = vld [vmem:[%s0 + $0x20] sm:$0xf]
    %v31 = vld [vmem:[%s0 + $0x24] sm:$0xf]
    %v32 = vld [vmem:[%s0 + $0x28] sm:$0xf]
    %v33 = vld [vmem:[%s0 + $0x2c] sm:$0xf]
    %v34 = vld [vmem:[%s0 + $0x30] sm:$0xf]
    %v35 = vld [vmem:[%s0 + $0x34] sm:$0xf]
    %v36 = vld [vmem:[%s0 + $0x38] sm:$0xf]
    %v37 = vld [vmem:[%s0 + $0x3c] sm:$0xf]
    %v38 = vld [vmem:[%s1] sm:$0xf]
    %v39 = vld [vmem:[%s1 + $0x4] sm:$0xf]
    %v56 = vunpack.c.l.b16 %v22
    %v57 = vunpack.c.l.b16 %v23
    %v58 = vunpack.c.l.b16 %v24
    %v59 = vunpack.c.l.b16 %v25
    %v60 = vunpack.c.l.b16 %v26
    %v61 = vunpack.c.l.b16 %v27
    %v62 = vunpack.c.l.b16 %v28
    %v63 = vunpack.c.l.b16 %v29
    %v64 = vunpack.c.l.b16 %v30
    %v65 = vunpack.c.l.b16 %v31
    %v66 = vunpack.c.l.b16 %v32
    %v67 = vunpack.c.l.b16 %v33
    %v68 = vunpack.c.l.b16 %v34
    %v69 = vunpack.c.l.b16 %v35
    %v70 = vunpack.c.l.b16 %v36
    %v71 = vunpack.c.l.b16 %v37
    %v72 = vpack.c.b16 %v57, %v56
    %v73 = vpack.c.b16 %v59, %v58
    %v74 = vpack.c.b16 %v61, %v60
    %v75 = vpack.c.b16 %v63, %v62
    %v76 = vpack.c.b16 %v65, %v64
    %v77 = vpack.c.b16 %v67, %v66
    %v78 = vpack.c.b16 %v69, %v68
    %v79 = vpack.c.b16 %v71, %v70
    %v82 = vunpack.c.l.b16 %v38
    %v83 = vunpack.c.l.b16 %v39
    %v84 = vpack.c.b16 %v83, %v82
    %vm86 = vcmask 130048
    %v88 = vsel %vm86, %v72, 0
    %v91 = vsel %vm86, %v73, 0
    %v94 = vsel %vm86, %v74, 0
    %v97 = vsel %vm86, %v75, 0
    %v100 = vsel %vm86, %v76, 0
    %v103 = vsel %vm86, %v77, 0
    %v106 = vsel %vm86, %v78, 0
    %v109 = vsel %vm86, %v79, 0
    %111 = vmatprep.subr.bf16.mxu0 0
    %112 = vmatpush1.bf16.msra.mxu0 %v84
    %113 = vmatprep.subr.bf16.mxu0 0
    %114 = vmatpush1.bf16.msra.mxu0 0
    %115 = vmatprep.subr.bf16.mxu0 0
    %116 = vmatpush1.bf16.msra.mxu0 0
    %117 = vmatprep.subr.bf16.mxu0 0
    %118 = vmatpush1.bf16.msra.mxu0 0
    %119 = vmatprep.subr.bf16.mxu0 0
    %120 = vmatpush1.bf16.msra.mxu0 0
    %121 = vmatprep.subr.bf16.mxu0 0
    %122 = vmatpush1.bf16.msra.mxu0 0
    %123 = vmatprep.subr.bf16.mxu0 0
    %124 = vmatpush1.bf16.msra.mxu0 0
    %125 = vmatprep.subr.bf16.mxu0 0
    %126 = vmatpush1.bf16.msra.mxu0 0
    %127 = vmatprep.subr.bf16.mxu0 0
    %128 = vmatpush1.bf16.msra.mxu0 0
    %129 = vmatprep.subr.bf16.mxu0 0
    %130 = vmatpush1.bf16.msra.mxu0 0
    %131 = vmatprep.subr.bf16.mxu0 0
    %132 = vmatpush1.bf16.msra.mxu0 0
    %133 = vmatprep.subr.bf16.mxu0 0
    %134 = vmatpush1.bf16.msra.mxu0 0
    %135 = vmatprep.subr.bf16.mxu0 0
    %136 = vmatpush1.bf16.msra.mxu0 0
    %137 = vmatprep.subr.bf16.mxu0 0
    %138 = vmatpush1.bf16.msra.mxu0 0
    %139 = vmatprep.subr.bf16.mxu0 0
    %140 = vmatpush1.bf16.msra.mxu0 0
    %141 = vmatprep.subr.bf16.mxu0 0
    %142 = vmatpush1.bf16.msra.mxu0 0
    %143 = vmatprep.mubr.bf16.mxu0 0
    %144 = vmatmul.mubr.bf16.gmra.mrb[0].mxu0 %v88
    %v145 = vpop.f32.mrb[0].mxu0
    %v146 = vadd.f32 0.0, %v145
    %v147 = vpop.f32.mrb[0].mxu0
    %v148 = vpop.f32.mrb[0].mxu0
    %v149 = vadd.f32 0.0, %v148
    %v150 = vpop.f32.mrb[0].mxu0
    %151 = vmatprep.mubr.bf16.mxu0 0
    %152 = vmatmul.mubr.bf16.gmra.mrb[0].mxu0 %v91
    %v153 = vpop.f32.mrb[0].mxu0
    %v154 = vadd.f32 0.0, %v153
    %v155 = vpop.f32.mrb[0].mxu0
    %v156 = vpop.f32.mrb[0].mxu0
    %v157 = vadd.f32 0.0, %v156
    %v158 = vpop.f32.mrb[0].mxu0
    %159 = vmatprep.mubr.bf16.mxu0 0
    %160 = vmatmul.mubr.bf16.gmra.mrb[0].mxu0 %v94
    %v161 = vpop.f32.mrb[0].mxu0
    %v162 = vadd.f32 0.0, %v161
    %v163 = vpop.f32.mrb[0].mxu0
    %v164 = vpop.f32.mrb[0].mxu0
    %v165 = vadd.f32 0.0, %v164
    %v166 = vpop.f32.mrb[0].mxu0
    %167 = vmatprep.mubr.bf16.mxu0 0
    %168 = vmatmul.mubr.bf16.gmra.mrb[0].mxu0 %v97
    %v169 = vpop.f32.mrb[0].mxu0
    %v170 = vadd.f32 0.0, %v169
    %v171 = vpop.f32.mrb[0].mxu0
    %v172 = vpop.f32.mrb[0].mxu0
    %v173 = vadd.f32 0.0, %v172
    %v174 = vpop.f32.mrb[0].mxu0
    %175 = vmatprep.mubr.bf16.mxu0 0
    %176 = vmatmul.mubr.bf16.gmra.mrb[0].mxu0 %v100
    %v177 = vpop.f32.mrb[0].mxu0
    %v178 = vadd.f32 0.0, %v177
    %v179 = vpop.f32.mrb[0].mxu0
    %v180 = vpop.f32.mrb[0].mxu0
    %v181 = vadd.f32 0.0, %v180
    %v182 = vpop.f32.mrb[0].mxu0
    %183 = vmatprep.mubr.bf16.mxu0 0
    %184 = vmatmul.mubr.bf16.gmra.mrb[0].mxu0 %v103
    %v185 = vpop.f32.mrb[0].mxu0
    %v186 = vadd.f32 0.0, %v185
    %v187 = vpop.f32.mrb[0].mxu0
    %v188 = vpop.f32.mrb[0].mxu0
    %v189 = vadd.f32 0.0, %v188
    %v190 = vpop.f32.mrb[0].mxu0
    %191 = vmatprep.mubr.bf16.mxu0 0
    %192 = vmatmul.mubr.bf16.gmra.mrb[0].mxu0 %v106
    %v193 = vpop.f32.mrb[0].mxu0
    %v194 = vadd.f32 0.0, %v193
    %v195 = vpop.f32.mrb[0].mxu0
    %v196 = vpop.f32.mrb[0].mxu0
    %v197 = vadd.f32 0.0, %v196
    %v198 = vpop.f32.mrb[0].mxu0
    %199 = vmatprep.mubr.bf16.mxu0 0
    %200 = vmatmul.mubr.bf16.gmra.mrb[0].mxu0 %v109
    %v201 = vpop.f32.mrb[0].mxu0
    %v202 = vadd.f32 0.0, %v201
    %v203 = vpop.f32.mrb[0].mxu0
    %v204 = vpop.f32.mrb[0].mxu0
    %v205 = vadd.f32 0.0, %v204
    %v206 = vpop.f32.mrb[0].mxu0
    %207 = vdwg.mxu0
    %v208 = vpack.c.bf16 %v149, %v146
    %v209 = vpack.c.bf16 %v157, %v154
    %v210 = vpack.c.bf16 %v165, %v162
    %v211 = vpack.c.bf16 %v173, %v170
    %v212 = vpack.c.bf16 %v181, %v178
    %v213 = vpack.c.bf16 %v189, %v186
    %v214 = vpack.c.bf16 %v197, %v194
    %v215 = vpack.c.bf16 %v205, %v202
    %v224 = vunpack.c.l.b16 %v208
    %v225 = vunpack.c.h.b16 %v208
    %v226 = vunpack.c.l.b16 %v209
    %v227 = vunpack.c.h.b16 %v209
    %v228 = vunpack.c.l.b16 %v210
    %v229 = vunpack.c.h.b16 %v210
    %v230 = vunpack.c.l.b16 %v211
    %v231 = vunpack.c.h.b16 %v211
    %v232 = vunpack.c.l.b16 %v212
    %v233 = vunpack.c.h.b16 %v212
    %v234 = vunpack.c.l.b16 %v213
    %v235 = vunpack.c.h.b16 %v213
    %v236 = vunpack.c.l.b16 %v214
    %v237 = vunpack.c.h.b16 %v214
    %v238 = vunpack.c.l.b16 %v215
    %v239 = vunpack.c.h.b16 %v215
    %v240 = vpack.c.b16 %v224, %v224
    %v241 = vpack.c.b16 %v225, %v225
    %v242 = vpack.c.b16 %v226, %v226
    %v243 = vpack.c.b16 %v227, %v227
    %v244 = vpack.c.b16 %v228, %v228
    %v245 = vpack.c.b16 %v229, %v229
    %v246 = vpack.c.b16 %v230, %v230
    %v247 = vpack.c.b16 %v231, %v231
    %v248 = vpack.c.b16 %v232, %v232
    %v249 = vpack.c.b16 %v233, %v233
    %v250 = vpack.c.b16 %v234, %v234
    %v251 = vpack.c.b16 %v235, %v235
    %v252 = vpack.c.b16 %v236, %v236
    %v253 = vpack.c.b16 %v237, %v237
    %v254 = vpack.c.b16 %v238, %v238
    %v255 = vpack.c.b16 %v239, %v239
    %vm272 = vcmask 257024
    %273 = vst.msk [vmem:[%s4] sm:$0xf] %vm272, %v240
    %274 = vst.msk [vmem:[%s4 + $0x4] sm:$0xf] %vm272, %v241
    %275 = vst.msk [vmem:[%s4 + $0x8] sm:$0xf] %vm272, %v242
    %276 = vst.msk [vmem:[%s4 + $0xc] sm:$0xf] %vm272, %v243
    %277 = vst.msk [vmem:[%s4 + $0x10] sm:$0xf] %vm272, %v244
    %278 = vst.msk [vmem:[%s4 + $0x14] sm:$0xf] %vm272, %v245
    %279 = vst.msk [vmem:[%s4 + $0x18] sm:$0xf] %vm272, %v246
    %280 = vst.msk [vmem:[%s4 + $0x1c] sm:$0xf] %vm272, %v247
    %281 = vst.msk [vmem:[%s4 + $0x20] sm:$0xf] %vm272, %v248
    %282 = vst.msk [vmem:[%s4 + $0x24] sm:$0xf] %vm272, %v249
    %283 = vst.msk [vmem:[%s4 + $0x28] sm:$0xf] %vm272, %v250
    %284 = vst.msk [vmem:[%s4 + $0x2c] sm:$0xf] %vm272, %v251
    %285 = vst.msk [vmem:[%s4 + $0x30] sm:$0xf] %vm272, %v252
    %286 = vst.msk [vmem:[%s4 + $0x34] sm:$0xf] %vm272, %v253
    %287 = vst.msk [vmem:[%s4 + $0x38] sm:$0xf] %vm272, %v254
    %288 = vst.msk [vmem:[%s4 + $0x3c] sm:$0xf] %vm272, %v255
    %v289 = vld [vmem:[%s2] sm:$0x3]
    %v291 = vsel %vm86, %v289, 0
    %293 = vmatprep.subr.bf16.mxu0 0
    %294 = vmatpush1.bf16.xpose.msra.mxu0 %v88
    %295 = vmatprep.subr.bf16.mxu0 0
    %296 = vmatpush1.bf16.xpose.msra.mxu0 %v91
    %297 = vmatprep.subr.bf16.mxu0 0
    %298 = vmatpush1.bf16.xpose.msra.mxu0 %v94
    %299 = vmatprep.subr.bf16.mxu0 0
    %300 = vmatpush1.bf16.xpose.msra.mxu0 %v97
    %301 = vmatprep.subr.bf16.mxu0 0
    %302 = vmatpush1.bf16.xpose.msra.mxu0 %v100
    %303 = vmatprep.subr.bf16.mxu0 0
    %304 = vmatpush1.bf16.xpose.msra.mxu0 %v103
    %305 = vmatprep.subr.bf16.mxu0 0
    %306 = vmatpush1.bf16.xpose.msra.mxu0 %v106
    %307 = vmatprep.subr.bf16.mxu0 0
    %308 = vmatpush1.bf16.xpose.msra.mxu0 %v109
    %309 = vmatprep.subr.bf16.mxu0 0
    %310 = vmatpush1.bf16.xpose.msra.mxu0 0
    %311 = vmatprep.subr.bf16.mxu0 0
    %312 = vmatpush1.bf16.xpose.msra.mxu0 0
    %313 = vmatprep.subr.bf16.mxu0 0
    %314 = vmatpush1.bf16.xpose.msra.mxu0 0
    %315 = vmatprep.subr.bf16.mxu0 0
    %316 = vmatpush1.bf16.xpose.msra.mxu0 0
    %317 = vmatprep.subr.bf16.mxu0 0
    %318 = vmatpush1.bf16.xpose.msra.mxu0 0
    %319 = vmatprep.subr.bf16.mxu0 0
    %320 = vmatpush1.bf16.xpose.msra.mxu0 0
    %321 = vmatprep.subr.bf16.mxu0 0
    %322 = vmatpush1.bf16.xpose.msra.mxu0 0
    %323 = vmatprep.subr.bf16.mxu0 0
    %324 = vmatpush1.bf16.xpose.msra.mxu0 0
    %325 = vmatprep.mubr.bf16.mxu0 0
    %326 = vmatmul.mubr.bf16.gmra.mrb[0].mxu0 %v291
    %v327 = vpop.f32.mrb[0].mxu0
    %v328 = vadd.f32 0.0, %v327
    %v329 = vpop.f32.mrb[0].mxu0
    %v330 = vpop.f32.mrb[0].mxu0
    %v331 = vpop.f32.mrb[0].mxu0
    %332 = vdwg.mxu0
    %333 = vst [vmem:[#allocation2] sm:$0xf] %v328
    %v334 = vld [vmem:[%s3] sm:$0xf]
    %v335 = vld [vmem:[%s3 + $0x4] sm:$0xf]
    %v338 = vunpack.c.l.b16 %v334
    %v339 = vunpack.c.l.b16 %v335
    %v340 = vpack.c.b16 %v339, %v338
    %342 = vmatprep.subr.bf16.mxu0 0
    %343 = vmatpush1.bf16.msra.mxu0 %v340
    %344 = vmatprep.subr.bf16.mxu0 0
    %345 = vmatpush1.bf16.msra.mxu0 0
    %346 = vmatprep.subr.bf16.mxu0 0
    %347 = vmatpush1.bf16.msra.mxu0 0
    %348 = vmatprep.subr.bf16.mxu0 0
    %349 = vmatpush1.bf16.msra.mxu0 0
    %350 = vmatprep.subr.bf16.mxu0 0
    %351 = vmatpush1.bf16.msra.mxu0 0
    %352 = vmatprep.subr.bf16.mxu0 0
    %353 = vmatpush1.bf16.msra.mxu0 0
    %354 = vmatprep.subr.bf16.mxu0 0
    %355 = vmatpush1.bf16.msra.mxu0 0
    %356 = vmatprep.subr.bf16.mxu0 0
    %357 = vmatpush1.bf16.msra.mxu0 0
    %358 = vmatprep.subr.bf16.mxu0 0
    %359 = vmatpush1.bf16.msra.mxu0 0
    %360 = vmatprep.subr.bf16.mxu0 0
    %361 = vmatpush1.bf16.msra.mxu0 0
    %362 = vmatprep.subr.bf16.mxu0 0
    %363 = vmatpush1.bf16.msra.mxu0 0
    %364 = vmatprep.subr.bf16.mxu0 0
    %365 = vmatpush1.bf16.msra.mxu0 0
    %366 = vmatprep.subr.bf16.mxu0 0
    %367 = vmatpush1.bf16.msra.mxu0 0
    %368 = vmatprep.subr.bf16.mxu0 0
    %369 = vmatpush1.bf16.msra.mxu0 0
    %370 = vmatprep.subr.bf16.mxu0 0
    %371 = vmatpush1.bf16.msra.mxu0 0
    %372 = vmatprep.subr.bf16.mxu0 0
    %373 = vmatpush1.bf16.msra.mxu0 0
    %374 = vmatprep.mubr.bf16.mxu0 0
    %375 = vmatmul.mubr.bf16.gmra.mrb[0].mxu0 %v88
    %v376 = vpop.f32.mrb[0].mxu0
    %v377 = vadd.f32 0.0, %v376
    %v378 = vpop.f32.mrb[0].mxu0
    %v379 = vpop.f32.mrb[0].mxu0
    %v380 = vadd.f32 0.0, %v379
    %v381 = vpop.f32.mrb[0].mxu0
    %382 = vmatprep.mubr.bf16.mxu0 0
    %383 = vmatmul.mubr.bf16.gmra.mrb[0].mxu0 %v91
    %v384 = vpop.f32.mrb[0].mxu0
    %v385 = vadd.f32 0.0, %v384
    %v386 = vpop.f32.mrb[0].mxu0
    %v387 = vpop.f32.mrb[0].mxu0
    %v388 = vadd.f32 0.0, %v387
    %v389 = vpop.f32.mrb[0].mxu0
    %390 = vmatprep.mubr.bf16.mxu0 0
    %391 = vmatmul.mubr.bf16.gmra.mrb[0].mxu0 %v94
    %v392 = vpop.f32.mrb[0].mxu0
    %v393 = vadd.f32 0.0, %v392
    %v394 = vpop.f32.mrb[0].mxu0
    %v395 = vpop.f32.mrb[0].mxu0
    %v396 = vadd.f32 0.0, %v395
    %v397 = vpop.f32.mrb[0].mxu0
    %398 = vmatprep.mubr.bf16.mxu0 0
    %399 = vmatmul.mubr.bf16.gmra.mrb[0].mxu0 %v97
    %v400 = vpop.f32.mrb[0].mxu0
    %v401 = vadd.f32 0.0, %v400
    %v402 = vpop.f32.mrb[0].mxu0
    %v403 = vpop.f32.mrb[0].mxu0
    %v404 = vadd.f32 0.0, %v403
    %v405 = vpop.f32.mrb[0].mxu0
    %406 = vmatprep.mubr.bf16.mxu0 0
    %407 = vmatmul.mubr.bf16.gmra.mrb[0].mxu0 %v100
    %v408 = vpop.f32.mrb[0].mxu0
    %v409 = vadd.f32 0.0, %v408
    %v410 = vpop.f32.mrb[0].mxu0
    %v411 = vpop.f32.mrb[0].mxu0
    %v412 = vadd.f32 0.0, %v411
    %v413 = vpop.f32.mrb[0].mxu0
    %414 = vmatprep.mubr.bf16.mxu0 0
    %415 = vmatmul.mubr.bf16.gmra.mrb[0].mxu0 %v103
    %v416 = vpop.f32.mrb[0].mxu0
    %v417 = vadd.f32 0.0, %v416
    %v418 = vpop.f32.mrb[0].mxu0
    %v419 = vpop.f32.mrb[0].mxu0
    %v420 = vadd.f32 0.0, %v419
    %v421 = vpop.f32.mrb[0].mxu0
    %422 = vmatprep.mubr.bf16.mxu0 0
    %423 = vmatmul.mubr.bf16.gmra.mrb[0].mxu0 %v106
    %v424 = vpop.f32.mrb[0].mxu0
    %v425 = vadd.f32 0.0, %v424
    %v426 = vpop.f32.mrb[0].mxu0
    %v427 = vpop.f32.mrb[0].mxu0
    %v428 = vadd.f32 0.0, %v427
    %v429 = vpop.f32.mrb[0].mxu0
    %430 = vmatprep.mubr.bf16.mxu0 0
    %431 = vmatmul.mubr.bf16.gmra.mrb[0].mxu0 %v109
    %v432 = vpop.f32.mrb[0].mxu0
    %v433 = vadd.f32 0.0, %v432
    %v434 = vpop.f32.mrb[0].mxu0
    %v435 = vpop.f32.mrb[0].mxu0
    %v436 = vadd.f32 0.0, %v435
    %v437 = vpop.f32.mrb[0].mxu0
    %438 = vdwg.mxu0
    %vm439 = vcmask 31744
    %440 = vst.msk [vmem:[%s6] sm:$0xff] %vm439, %v377
    %441 = vst.msk [vmem:[%s6 + $0x8] sm:$0xff] %vm439, %v380
    %442 = vst.msk [vmem:[%s6 + $0x10] sm:$0xff] %vm439, %v385
    %443 = vst.msk [vmem:[%s6 + $0x18] sm:$0xff] %vm439, %v388
    %444 = vst.msk [vmem:[%s6 + $0x20] sm:$0xff] %vm439, %v393
    %445 = vst.msk [vmem:[%s6 + $0x28] sm:$0xff] %vm439, %v396
    %446 = vst.msk [vmem:[%s6 + $0x30] sm:$0xff] %vm439, %v401
    %447 = vst.msk [vmem:[%s6 + $0x38] sm:$0xff] %vm439, %v404
    %448 = vst.msk [vmem:[%s6 + $0x40] sm:$0xff] %vm439, %v409
    %449 = vst.msk [vmem:[%s6 + $0x48] sm:$0xff] %vm439, %v412
    %450 = vst.msk [vmem:[%s6 + $0x50] sm:$0xff] %vm439, %v417
    %451 = vst.msk [vmem:[%s6 + $0x58] sm:$0xff] %vm439, %v420
    %452 = vst.msk [vmem:[%s6 + $0x60] sm:$0xff] %vm439, %v425
    %453 = vst.msk [vmem:[%s6 + $0x68] sm:$0xff] %vm439, %v428
    %454 = vst.msk [vmem:[%s6 + $0x70] sm:$0xff] %vm439, %v433
    %455 = vst.msk [vmem:[%s6 + $0x78] sm:$0xff] %vm439, %v436
    // Predicated region
    $region18: #{tpu_custom_call.1} parent=1 // pred_check
      _
    $region19: #{tpu_custom_call.1} parent=1 // pred_check_branch
      %457 = sbr.rel (0) target = $region21
    $region20: #{tpu_custom_call.1} parent=1 // pred_region
      _
    $region21: #{tpu_custom_call.1} parent=1 // pred_fallthru
      _
    // Predicated region
    $region22: #{tpu_custom_call.1} parent=1 // pred_check
      _
    $region23: #{tpu_custom_call.1} parent=1 // pred_check_branch
      %459 = sbr.rel (0) target = $region25
    $region24: #{tpu_custom_call.1} parent=1 // pred_region
      %s461 = ssub.s32 64, 64
      %462 = vsyncadd [#allocation3], %s461
      %s464 = sshll.u32 [#allocation2], 4
      %s465 = int_to_ptr.vmem [resolvable:$true] %s464
      %467 = dma.vmem_to_hbm [thread:$0]  %s465, 64, %s5, [#allocation3]
    $region25: #{tpu_custom_call.1} parent=1 // pred_fallthru
      _
    // Predicated region
    $region26: #{tpu_custom_call.1} parent=1 // pred_check
      _
    $region27: #{tpu_custom_call.1} parent=1 // pred_check_branch
      %469 = sbr.rel (0) target = $region29
    $region28: #{tpu_custom_call.1} parent=1 // pred_region
      _
    $region29: #{tpu_custom_call.1} parent=1 // pred_fallthru
      _
    // Predicated region
    $region30: #{tpu_custom_call.1} parent=1 // pred_check
      _
    $region31: #{tpu_custom_call.1} parent=1 // pred_check_branch
      %471 = sbr.rel (0) target = $region33
    $region32: #{tpu_custom_call.1} parent=1 // pred_region
      _
    $region33: #{tpu_custom_call.1} parent=1 // pred_fallthru
      _
    // Predicated region
    $region34: #{tpu_custom_call.1} parent=1 // pred_check
      _
    $region35: #{tpu_custom_call.1} parent=1 // pred_check_branch
      %473 = sbr.rel (0) target = $region37
    $region36: #{tpu_custom_call.1} parent=1 // pred_region
      %474 = dma.done [#allocation3], 64
    $region37: #{tpu_custom_call.1} parent=1 // pred_fallthru
      _
    // Predicated region
    $region38: #{tpu_custom_call.1} parent=1 // pred_check
      _
    $region39: #{tpu_custom_call.1} parent=1 // pred_check_branch
      %476 = sbr.rel (0) target = $region41
    $region40: #{tpu_custom_call.1} parent=1 // pred_region
      _
    $region41: #{tpu_custom_call.1} parent=1 // pred_fallthru
      _
    %477 = vsyncpa [#allocation3], 1

</llo_original>
